<compile_context>
chip_gen: v5e
topology: v5e:2x2
jax: 0.10.0
libtpu: 0.0.40
codegen_flags: <defaults>
</compile_context>

<pallas_src>
import math

import jax
import jax.numpy as jnp
from jax.experimental import pallas as pl
from jax.experimental.pallas import tpu as pltpu


def _copy_kernel(x_ref, o_ref):
    # Lane-dense elementwise pass-through of one (row_block, cols) VMEM tile.
    o_ref[...] = x_ref[...]


# Per-buffer VMEM budget.  With in + out, double-buffered (4 buffers), this
# stays at <= 8 MiB: under v5e's 16 MiB default scoped VMEM and far under
# v7x's 64 MiB physical VMEM, so one tiling runs on every generation.
_PER_BUFFER_BYTES = 2 * 1024 * 1024


def pallas_identity_representation(x: jax.Array, *, use_kernel: bool = True) -> jax.Array:
    """Hot-path hook a concrete Formatter subclass would fill in.

    For a *true* identity representation the cheapest option is to return `x`
    unchanged (`use_kernel=False`) — zero HBM traffic.  The kernel path below
    demonstrates the lane-dense tiled VMEM pass-through a real representation
    kernel would be built on.
    """
    if not use_kernel:
        return x  # identity bypass: no HBM read/write at all

    orig_shape = x.shape
    n = math.prod(orig_shape) if orig_shape else 1

    # Flatten to a lane-dense 2D view.  For NCHW this is (B*C, H*W): the last
    # dim (256 for the 16x16 example) is a multiple of 128, so stores are
    # full-lane, unmasked vst.
    if x.ndim >= 2:
        cols = math.prod(orig_shape[-2:])
    else:
        cols = max(n, 1)
    rows = max(n // cols, 1)
    x2d = x.reshape(rows, cols)

    # Largest row block that fits the per-buffer VMEM budget.  Single full
    # block when possible (tiny arrays); otherwise a multiple of 8 rows so the
    # (8, 128) block rule is satisfied, giving a >=2-step parallel grid that
    # v7x's two TensorCores can split.
    bytes_per_row = cols * x.dtype.itemsize
    max_rows = max(1, _PER_BUFFER_BYTES // max(bytes_per_row, 1))
    if rows <= max_rows:
        row_block = rows            # block == full dim -> always legal
    else:
        row_block = max(8, (max_rows // 8) * 8)
    grid = (pl.cdiv(rows, row_block),)

    spec = pl.BlockSpec((row_block, cols), lambda i: (i, 0))

    out2d = pl.pallas_call(
        _copy_kernel,
        out_shape=jax.ShapeDtypeStruct((rows, cols), x.dtype),
        grid=grid,
        in_specs=[spec],
        out_specs=spec,
        input_output_aliases={0: 0},   # identity: output aliases input buffer
        compiler_params=pltpu.CompilerParams(
            dimension_semantics=("parallel",),
            # Explicit scoped-VMEM limit: safe on all generations
            # (== v6e/v7x default, < v5e physical) and leaves headroom for
            # the 4 double-buffered tiles (<= 8 MiB).
            vmem_limit_bytes=32 * 1024 * 1024,
        ),
    )(x2d)
    return out2d.reshape(orig_shape)


class Formatter:
    """JAX/Pallas port of the (abstract) PyTorch `Formatter` module."""

    def __init__(self):
        # Reference __init__ defines no parameters.
        pass

    def createRepresentation(self, x, g):
        # TODO(synk): abstract in the reference module (`pass` -> None);
        # concrete subclasses route their compute through
        # `pallas_identity_representation` (or a real kernel) here.
        return None

    def forward(self, x, g):
        output = self.createRepresentation(x, g)
        return output

    def __call__(self, x, g):
        return self.forward(x, g)

    # TODO(synk): save_model / load_model are torch checkpoint file I/O with
    # no Pallas/kernel equivalent; intentionally not implemented.


if __name__ == "__main__":
    key = jax.random.PRNGKey(0)
    kx, kg = jax.random.split(key)

    # Small deterministic inputs consistent with a typical (x, g) pair:
    # an NCHW feature map and a conditioning/goal vector.
    x = jax.random.normal(kx, (2, 4, 16, 16), dtype=jnp.float32)
    g = jax.random.normal(kg, (2, 8), dtype=jnp.float32)

    # 1) Exact forward-pass semantics of the reference module: returns None.
    model = Formatter()
    out = model(x, g)
    assert out is None, "Formatter.forward must return None (abstract base)."

    # 2) Exercise the Pallas kernel hook once and block on the result.
    repr_out = pallas_identity_representation(x)
    jax.block_until_ready(repr_out)
    assert repr_out.shape == x.shape and repr_out.dtype == x.dtype
    assert bool(jnp.array_equal(repr_out, x))

    # 3) The zero-cost identity bypass path a concrete subclass could use.
    bypass = pallas_identity_representation(x, use_kernel=False)
    assert bypass is x

    print("KERNEL_OK")
</pallas_src>

<mosaic_0001>
module attributes {stable_mosaic.version = 11 : i64} {
  func.func @_copy_kernel(%arg0: i32, %arg1: memref<8x256xf32, #tpu.memory_space<vmem>>, %arg2: memref<8x256xf32, #tpu.memory_space<vmem>>) attributes {dimension_semantics = [#tpu.dimension_semantics<parallel>], iteration_bounds = array<i64: 1>, scalar_prefetch = 0 : i64, scratch_operands = 0 : i64, tpu.core_type = #tpu.core_type<tc>, window_params = [{transform_indices = @transform_0, window_bounds = array<i64: 8, 256>}, {transform_indices = @transform_1, window_bounds = array<i64: 8, 256>}]} {
    %c0 = arith.constant 0 : index
    %c0_0 = arith.constant 0 : index
    %0 = vector.load %arg1[%c0, %c0_0] : memref<8x256xf32, #tpu.memory_space<vmem>>, vector<8x256xf32>
    %c0_1 = arith.constant 0 : index
    %c0_2 = arith.constant 0 : index
    %1 = vector.load %arg2[%c0_1, %c0_2] : memref<8x256xf32, #tpu.memory_space<vmem>>, vector<8x256xf32>
    tpu.vector_store %arg2[%c0_1, %c0_2], %0 {strides = array<i32>} : memref<8x256xf32, #tpu.memory_space<vmem>>, vector<8x256xf32>,
    return
  }
  func.func @transform_0(%arg0: i32) -> (i32, i32) {
    %c0_i32 = arith.constant 0 : i32
    %c0_i32_0 = arith.constant 0 : i32
    return %arg0, %c0_i32 : i32, i32
  }
  func.func @transform_1(%arg0: i32) -> (i32, i32) {
    %c0_i32 = arith.constant 0 : i32
    %c0_i32_0 = arith.constant 0 : i32
    return %arg0, %c0_i32 : i32, i32
  }
}

</mosaic_0001>

<llo_original>
// kernel: tpu_custom_call.1
$region0: #{tpu_custom_call.1}
  #allocation0 [shape = 'u32[]', space=smem, size = 0x4, offset = 0x4, fixed_abs, tag = 'smem constant byte address 0x4 - core index']
  #allocation1 [shape = 'u32[72,128]{1,0:T(1,128)}', space=vmem, size = 0x9000, scoped, tag = 'internal scratch']
  %s0 = inlined_call_operand.hbm [shape: f32[8,256], index: 0, kind: input, shape index: {}, may-alias: {0,1}]
  %s1 = inlined_call_operand.hbm [shape: f32[8,256], index: 1, kind: output, shape index: {}, may-alias: {0,1}]
  %s2 = sld [smem:[#allocation0]]
  $region18: #{tpu_custom_call.1} parent=0
    _
  %s4 = ssub.s32 1, %s2
  %s5 = scalar_select 0, %s4, %s2
  $region1: #{tpu_custom_call.1} parent=0
    #allocation2 [shape = 'u8[8192]{0}', space=vmem, size = 0x2000, scoped, tag = 'input window, operand 0, single buffered']
    #allocation3 [shape = 's32[1]{0}', space=sflag, size = 0x4, scoped, tag = 'scoped memory for tpu_custom_call.1']
    #allocation4 [shape = 's32[1]{0}', space=sflag, size = 0x4, scoped, tag = 'scoped memory for tpu_custom_call.1']
    #allocation5 [shape = 'u8[8192]{0}', space=vmem, size = 0x2000, scoped, tag = 'output window, operand 0, single buffered']
    %6 = vsyncpa [#allocation3], 0
    %7 = vsyncpa [#allocation4], 0
    // Predicated region
    $region2: #{tpu_custom_call.1} parent=1 // pred_check
      _
    $region3: #{tpu_custom_call.1} parent=1 // pred_check_branch
      %9 = sbr.rel (0) target = $region5
    $region4: #{tpu_custom_call.1} parent=1 // pred_region
      %11 = vsyncadd [#allocation3], 0
      %s13 = sshll.u32 %s0, 4
      %s14 = int_to_ptr.hbm [resolvable:$true] %s13
      %s15 = sshll.u32 [#allocation2], 4
      %s16 = int_to_ptr.vmem [resolvable:$true] %s15
      %18 = dma.hbm_to_vmem [thread:$0]  %s14, 256, %s16, [#allocation3]
    $region5: #{tpu_custom_call.1} parent=1 // pred_fallthru
      _
    // Predicated region
    $region6: #{tpu_custom_call.1} parent=1 // pred_check
      _
    $region7: #{tpu_custom_call.1} parent=1 // pred_check_branch
      %20 = sbr.rel (0) target = $region9
    $region8: #{tpu_custom_call.1} parent=1 // pred_region
      %22 = dma.done [#allocation3], 256
    $region9: #{tpu_custom_call.1} parent=1 // pred_fallthru
      _
    %v23 = vld [vmem:[#allocation2] sm:$0xff]
    %v24 = vld [vmem:[#allocation2 + $0x8] sm:$0xff]
    %25 = vst [vmem:[#allocation5] sm:$0xff] %v23
    %26 = vst [vmem:[#allocation5 + $0x8] sm:$0xff] %v24
    // Predicated region
    $region10: #{tpu_custom_call.1} parent=1 // pred_check
      _
    $region11: #{tpu_custom_call.1} parent=1 // pred_check_branch
      %28 = sbr.rel (0) target = $region13
    $region12: #{tpu_custom_call.1} parent=1 // pred_region
      %30 = vsyncadd [#allocation4], 0
      %s32 = sshll.u32 [#allocation5], 4
      %s33 = int_to_ptr.vmem [resolvable:$true] %s32
      %s34 = sshll.u32 %s1, 4
      %s35 = int_to_ptr.hbm [resolvable:$true] %s34
      %37 = dma.vmem_to_hbm [thread:$0]  %s33, 256, %s35, [#allocation4]
    $region13: #{tpu_custom_call.1} parent=1 // pred_fallthru
      _
    // Predicated region
    $region14: #{tpu_custom_call.1} parent=1 // pred_check
      _
    $region15: #{tpu_custom_call.1} parent=1 // pred_check_branch
      %39 = sbr.rel (0) target = $region17
    $region16: #{tpu_custom_call.1} parent=1 // pred_region
      %41 = dma.done [#allocation4], 256
    $region17: #{tpu_custom_call.1} parent=1 // pred_fallthru
      _
    %42 = vsyncpa [#allocation3], 1
    %43 = vsyncpa [#allocation4], 1

</llo_original>
